<compile_context>
chip_gen: v6e
topology: v6e:2x2x1
jax: 0.10.0
libtpu: 0.0.40
codegen_flags: <defaults>
</compile_context>

<pallas_src>
import functools

import jax
import jax.numpy as jnp
from jax.experimental import pallas as pl
from jax.experimental.pallas import tpu as pltpu


# ----------------------------------------------------------------------------
# Device-generation helpers (VMEM sizing, bf16 vector-math availability).
# ----------------------------------------------------------------------------
@functools.lru_cache(maxsize=1)
def _device_kind() -> str:
    try:
        return jax.devices()[0].device_kind.lower()
    except Exception:
        return ""


def _is_v7() -> bool:
    k = _device_kind()
    return ("v7" in k) or ("7x" in k)


def _has_bf16_vector_units() -> bool:
    # bf16 VPU + bf16 EUP exist from v6e (Trillium) onward; v4/v5e do not.
    k = _device_kind()
    return _is_v7() or ("v6" in k) or ("trillium" in k)


# ----------------------------------------------------------------------------
# Kernel: one grid step over a lane-dense (C, TM) logits tile.
# Classes live on sublanes (axis 0), samples on the 128-lane axis (axis 1).
# ----------------------------------------------------------------------------
def _ce_kernel(*refs, ignore_index, n_valid, has_pfw, compute_dtype):
    if has_pfw:
        logits_ref, tgt_ref, cw_ref, pfw_ref, out_ref, acc_ref = refs
    else:
        logits_ref, tgt_ref, cw_ref, out_ref, acc_ref = refs
        pfw_ref = None

    j = pl.program_id(1)

    @pl.when(j == 0)
    def _():
        acc_ref[...] = jnp.zeros_like(acc_ref)

    x = logits_ref[...].astype(compute_dtype)        # (C, TM): bf16 on v6e/v7x, else f32
    tgt = tgt_ref[...]                               # (1, TM) int32
    cw = cw_ref[...]                                 # (C, 1)  f32 (resident)
    c, tm = x.shape

    # Global sample index of each lane; the grid may overrun N (clamped index
    # map / partial last block), so mask the tail by global index.  No pre-mask
    # of x is needed: all ops below are per-column, so garbage in invalid
    # columns never contaminates valid ones and is zeroed by the final select.
    tile_idx = pl.program_id(0) * pl.num_programs(1) + j
    col = tile_idx * tm + jax.lax.broadcasted_iota(jnp.int32, (1, tm), 1)
    valid = jnp.logical_and(col < n_valid, tgt != ignore_index)   # (1, TM)

    # Numerically stable log-sum-exp over the class (sublane) axis, on shifted
    # logits.  The max m cancels in  lse - x[y] == log(sum exp(x - m)) - (x[y]-m).
    m = jnp.max(x, axis=0, keepdims=True)                          # (1, TM)
    xm = x - m                                                     # (C, TM)
    p = jnp.exp(xm)                                                # (C, TM)
    sumexp = jnp.sum(p.astype(jnp.float32), axis=0, keepdims=True)  # f32 accum
    lse_m = jnp.log(sumexp)                                        # (1, TM) f32

    # One-hot gather of the target's shifted logit and class weight.
    # Targets outside [0, C) that are not ignore_index contribute 0 loss
    # (PyTorch's CrossEntropyLoss would raise instead).
    class_iota = jax.lax.broadcasted_iota(jnp.int32, (c, tm), 0)
    onehot = class_iota == tgt                                     # (C, TM)
    zero = jnp.zeros([], xm.dtype)
    x_t = jnp.sum(jnp.where(onehot, xm, zero), axis=0,
                  keepdims=True).astype(jnp.float32)               # (1, TM)
    w_t = jnp.sum(jnp.where(onehot, cw, 0.0), axis=0, keepdims=True)  # (1, TM) f32

    loss = w_t * (lse_m - x_t)                                     # (1, TM) f32
    if has_pfw:
        loss = loss * pfw_ref[...]
    loss = jnp.where(valid, loss, 0.0)                             # zero tail / ignored

    acc_ref[...] += loss

    @pl.when(j == pl.num_programs(1) - 1)
    def _():
        out_ref[...] = jnp.sum(acc_ref[...], axis=1, keepdims=True)[None]  # (1,1,1)


# ----------------------------------------------------------------------------
# Host-side wrapper.
# ----------------------------------------------------------------------------
def _choose_tm(n, c, itemsize):
    """Largest sample tile (multiple of 128) within the per-buffer VMEM budget."""
    budget = (4 << 20) if _is_v7() else (8 << 20)   # v7x: 64 MiB VMEM vs 128 MiB
    tm = (budget // max(1, c * itemsize)) // 128 * 128
    tm = max(128, min(32768, tm))                   # 16k-64k samples per block
    n_padded = -(-n // 128) * 128
    return min(tm, max(128, n_padded))


def weighted_ce_sum(logits, targets, class_weights, per_frame_weights=None,
                    ignore_index=999, tm=None, logits_are_lane_dense=False):
    """sum_n( CE(logits_n, targets_n) * pfw_n );  ignore_index rows give 0."""
    logits = jnp.asarray(logits)                    # keep input dtype (bf16 ok)
    if logits_are_lane_dense:
        logits_t = logits                           # already (C, N)
        c, n = logits_t.shape
    else:
        n, c = logits.shape
        # TODO(synk): this transpose to the lane-dense (C, N) layout is the only
        # remaining pre-kernel HBM copy; callers that can emit (C, N) logits
        # should pass logits_are_lane_dense=True.  allow_input_fusion below lets
        # XLA fold it into the kernel input when possible.
        logits_t = logits.T

    targets = jnp.asarray(targets, jnp.int32).reshape(1, n)
    cw = jnp.asarray(class_weights, jnp.float32).reshape(c, 1)
    has_pfw = per_frame_weights is not None

    itemsize = jnp.dtype(logits.dtype).itemsize
    if tm is None:
        tm = _choose_tm(n, c, itemsize)

    # bf16 math only where bf16 VPU/EUP exist (v6e, v7x); promote to f32 on v5e.
    if logits_t.dtype == jnp.bfloat16 and _has_bf16_vector_units():
        compute_dtype = jnp.bfloat16
    else:
        compute_dtype = jnp.float32

    n_tiles = pl.cdiv(n, tm)
    half = pl.cdiv(n_tiles, 2)                      # 2-way split for v7x's two TCs
    last_tile = n_tiles - 1

    def lane_map(p, j):
        # Clamp so a core's overhang re-reads the last real block; those
        # columns are masked in-kernel by the global sample index.
        return (0, jnp.minimum(p * half + j, last_tile))

    in_specs = [
        pl.BlockSpec((c, tm), lane_map),            # logits tile (classes x samples)
        pl.BlockSpec((1, tm), lane_map),            # targets tile
        pl.BlockSpec((c, 1), lambda p, j: (0, 0)),  # class weights (resident)
    ]
    args = [logits_t, targets, cw]
    if has_pfw:
        in_specs.append(pl.BlockSpec((1, tm), lane_map))
        args.append(jnp.asarray(per_frame_weights, jnp.float32).reshape(1, n))

    # VMEM accounting: double-buffered inputs + per-lane accumulator (+ margin).
    block_bytes = c * tm * itemsize
    aux_bytes = tm * 4 * (2 if has_pfw else 1)
    cw_bytes = c * 128 * 4                          # (C, 1) pads lanes to 128
    need = 2 * (block_bytes + aux_bytes + cw_bytes) + tm * 4 + (2 << 20)
    vmem_cap = (48 << 20) if _is_v7() else (96 << 20)
    if need > vmem_cap:
        # TODO(synk): very large n_classes needs a class-axis grid with online
        # (streaming) log-sum-exp accumulation; not implemented here.
        raise NotImplementedError(
            f"n_classes={c}: needs ~{need >> 20} MiB VMEM (> {vmem_cap >> 20} MiB)")
    vmem_limit = int(min(max(2 * need, 32 << 20), 64 << 20))

    kernel = functools.partial(_ce_kernel, ignore_index=ignore_index,
                               n_valid=n, has_pfw=has_pfw,
                               compute_dtype=compute_dtype)

    # TODO(synk): on v7x, verify the leading size-2 "parallel" axis actually
    # shards across both TensorCores; if not, switch to
    # (pltpu.CORE_PARALLEL, pltpu.ARBITRARY) or an explicit pl.core_map split.
    partials = pl.pallas_call(
        kernel,
        out_shape=jax.ShapeDtypeStruct((2, 1, 1), jnp.float32),
        grid_spec=pltpu.PrefetchScalarGridSpec(
            num_scalar_prefetch=0,
            grid=(2, half),
            in_specs=in_specs,
            out_specs=pl.BlockSpec((1, 1, 1), lambda p, j: (p, 0, 0)),
            scratch_shapes=[pltpu.VMEM((1, tm), jnp.float32)],
        ),
        compiler_params=pltpu.CompilerParams(
            dimension_semantics=("parallel", "arbitrary"),
            allow_input_fusion=[True] + [False] * (len(args) - 1),
            vmem_limit_bytes=vmem_limit,
        ),
    )(*args)
    return jnp.sum(partials)


def weighted_ce_mean(logits, targets, class_weights, per_frame_weights=None,
                     ignore_index=999, tm=None, logits_are_lane_dense=False):
    """mean_n( CE(logits_n, targets_n) * pfw_n )  -- matches torch.mean(loss)."""
    n = jnp.asarray(logits).shape[1 if logits_are_lane_dense else 0]
    return weighted_ce_sum(logits, targets, class_weights, per_frame_weights,
                           ignore_index, tm, logits_are_lane_dense) / jnp.float32(n)


class CEPallas:
    """JAX/Pallas port of the PyTorch `CE` module (forward pass)."""

    def __init__(self, n_classes, class_weights, alpha=2, ignore_index=999,
                 weight=None):
        self.n_classes = list(n_classes)
        self.class_weights = jnp.asarray(class_weights, jnp.float32)
        self.alpha = alpha
        self.ignore_index = ignore_index
        self.weight = weight

    def __call__(self, output, targets, per_frame_weights=None):
        targets_flat = jnp.asarray(targets).reshape(-1)
        if isinstance(output, (list, tuple)):
            pfw_flat = None
            if per_frame_weights is not None:
                pfw_flat = jnp.asarray(per_frame_weights).reshape(-1)
            # One kernel call per refinement stage, summed as scalars:
            # avoids concatenating / re-copying every stage's logits in HBM.
            total_loss = jnp.float32(0.0)
            for out in output:
                total_loss += weighted_ce_mean(
                    jnp.asarray(out).reshape(-1, self.n_classes[0]),
                    targets_flat, self.class_weights,
                    per_frame_weights=pfw_flat,
                    ignore_index=self.ignore_index)
        else:
            total_loss = jnp.float32(0.0)
            out = jnp.asarray(output)
            for i in range(len(self.n_classes)):
                alpha = self.alpha if i == 1 else 1
                total_loss += alpha * weighted_ce_mean(
                    out.reshape(-1, self.n_classes[i]),
                    targets_flat,
                    self.class_weights,
                    per_frame_weights=None,
                    ignore_index=self.ignore_index)
        # Mirrors the PyTorch truthiness check (weight == 0 leaves the loss unscaled).
        return self.weight * total_loss if self.weight else total_loss


# ----------------------------------------------------------------------------
# Pure-JAX reference and self-test.
# ----------------------------------------------------------------------------
def _ref_ce_mean(logits, targets, cw, pfw, ignore_index):
    """Pure-JAX reference: reduction='none' weighted CE * pfw, then mean over N."""
    logits = jnp.asarray(logits, jnp.float32)
    targets = jnp.asarray(targets, jnp.int32)
    lse = jax.nn.logsumexp(logits, axis=-1)
    valid = targets != ignore_index
    safe_t = jnp.where(valid, targets, 0)
    x_t = jnp.take_along_axis(logits, safe_t[:, None], axis=1)[:, 0]
    w_t = jnp.asarray(cw, jnp.float32)[safe_t]
    loss = jnp.where(valid, w_t * (lse - x_t), 0.0)
    if pfw is not None:
        loss = loss * jnp.asarray(pfw, jnp.float32)
    return jnp.mean(loss)


if __name__ == "__main__":
    # Small deterministic setup: 2 refinement stages, 8 classes, batch=2, 16 frames.
    B, T, C = 2, 16, 8
    n_classes = [C, C]
    class_weights = [0.5 + 0.1 * k for k in range(C)]

    key = jax.random.PRNGKey(0)
    k1, k2, k3, k4, k5, k6 = jax.random.split(key, 6)

    out_stage0 = jax.random.normal(k1, (B, T, C), jnp.float32)
    out_stage1 = jax.random.normal(k2, (B, T, C), jnp.float32)
    targets = jax.random.randint(k3, (B, T), 0, C, jnp.int32)
    targets = targets.at[0, 0].set(999).at[1, 5].set(999)   # ignored frames
    per_frame_weights = jax.random.uniform(k4, (B, T), jnp.float32)

    ce = CEPallas(n_classes, class_weights, alpha=2, ignore_index=999, weight=None)

    # Branch 1: output is a list (uses per-frame weights), one call per stage.
    loss_list = ce([out_stage0, out_stage1], targets, per_frame_weights)
    # Branch 2: output is a single tensor (alpha applied to stage i == 1).
    loss_single = ce(out_stage0, targets)

    tf = targets.reshape(-1)
    pf = per_frame_weights.reshape(-1)
    ref_list = (_ref_ce_mean(out_stage0.reshape(-1, C), tf, class_weights, pf, 999)
                + _ref_ce_mean(out_stage1.reshape(-1, C), tf, class_weights, pf, 999))
    ref_single = (_ref_ce_mean(out_stage0.reshape(-1, C), tf, class_weights, None, 999)
                  + 2 * _ref_ce_mean(out_stage0.reshape(-1, C), tf, class_weights, None, 999))

    checks = [(loss_list, ref_list, 1e-4, 1e-5),
              (loss_single, ref_single, 1e-4, 1e-5)]

    # Multi-tile path: N=300 (not a multiple of 128) with forced tm=128 so the
    # grid has several steps per core and exercises index clamping + tail masking.
    Nbig = 300
    big_logits = jax.random.normal(k5, (Nbig, C), jnp.float32) * 3.0
    big_tgt = jax.random.randint(k6, (Nbig,), 0, C, jnp.int32).at[7].set(999)
    big_pfw = jax.random.uniform(jax.random.PRNGKey(1), (Nbig,), jnp.float32)
    got_big = weighted_ce_mean(big_logits, big_tgt, class_weights, big_pfw,
                               ignore_index=999, tm=128)
    ref_big = _ref_ce_mean(big_logits, big_tgt, class_weights, big_pfw, 999)
    checks.append((got_big, ref_big, 1e-4, 1e-5))

    # bf16 logits: computed in bf16 on v6e/v7x, promoted to f32 on older chips.
    bf_logits = big_logits.astype(jnp.bfloat16)
    got_bf = weighted_ce_mean(bf_logits, big_tgt, class_weights, big_pfw,
                              ignore_index=999)
    ref_bf = _ref_ce_mean(bf_logits.astype(jnp.float32), big_tgt, class_weights,
                          big_pfw, 999)
    checks.append((got_bf, ref_bf, 5e-2, 5e-2))

    jax.block_until_ready([c[0] for c in checks])
    for got, ref, rt, at in checks:
        if not bool(jnp.allclose(got, ref, rtol=rt, atol=at)):
            raise AssertionError(f"mismatch: pallas={got} ref={ref}")
    print("KERNEL_OK")
</pallas_src>

<mosaic_0001>
module attributes {stable_mosaic.version = 11 : i64} {
  func.func @_ce_kernel(%arg0: i32, %arg1: i32, %arg2: memref<8x128xf32, #tpu.memory_space<vmem>>, %arg3: memref<1x128xi32, #tpu.memory_space<vmem>>, %arg4: memref<8x1xf32, #tpu.memory_space<vmem>>, %arg5: memref<1x128xf32, #tpu.memory_space<vmem>>, %arg6: memref<1x1x1xf32, #tpu.memory_space<vmem>>, %arg7: memref<1x128xf32, #tpu.memory_space<vmem>>) attributes {dimension_semantics = [#tpu.dimension_semantics<parallel>, #tpu.dimension_semantics<arbitrary>], iteration_bounds = array<i64: 2, 1>, scalar_prefetch = 0 : i64, scratch_operands = 1 : i64, tpu.core_type = #tpu.core_type<tc>, window_params = [{transform_indices = @transform_0, window_bounds = array<i64: 8, 128>}, {transform_indices = @transform_1, window_bounds = array<i64: 1, 128>}, {pipeline_mode = #tpu.pipeline_mode<synchronous>, transform_indices = @transform_2, window_bounds = array<i64: 8, 1>}, {transform_indices = @transform_3, window_bounds = array<i64: 1, 128>}, {transform_indices = @transform_4, window_bounds = array<i64: 1, 1, 1>}]} {
    %c0_i32 = arith.constant 0 : i32
    %0 = arith.cmpi eq, %arg1, %c0_i32 : i32
    %1 = arith.extui %0 : i1 to i32
    %c0_i32_0 = arith.constant 0 : i32
    %2 = arith.cmpi ne, %1, %c0_i32_0 : i32
    scf.if %2 {
      %cst_20 = arith.constant 0.000000e+00 : f32
      %50 = vector.broadcast %cst_20 : f32 to vector<1x128xf32>
      %c0_21 = arith.constant 0 : index
      %c0_22 = arith.constant 0 : index
      %51 = vector.load %arg7[%c0_21, %c0_22] : memref<1x128xf32, #tpu.memory_space<vmem>>, vector<1x128xf32>
      tpu.vector_store %arg7[%c0_21, %c0_22], %50 {strides = array<i32>} : memref<1x128xf32, #tpu.memory_space<vmem>>, vector<1x128xf32>,
    } else {
    }
    %c0 = arith.constant 0 : index
    %c0_1 = arith.constant 0 : index
    %3 = vector.load %arg2[%c0, %c0_1] : memref<8x128xf32, #tpu.memory_space<vmem>>, vector<8x128xf32>
    %c0_2 = arith.constant 0 : index
    %c0_3 = arith.constant 0 : index
    %4 = vector.load %arg3[%c0_2, %c0_3] : memref<1x128xi32, #tpu.memory_space<vmem>>, vector<1x128xi32>
    %c0_4 = arith.constant 0 : index
    %c0_5 = arith.constant 0 : index
    %5 = vector.load %arg4[%c0_4, %c0_5] : memref<8x1xf32, #tpu.memory_space<vmem>>, vector<8x1xf32>
    %c1_i32 = arith.constant 1 : i32
    %6 = arith.muli %arg0, %c1_i32 : i32
    %7 = arith.addi %6, %arg1 : i32
    %c128_i32 = arith.constant 128 : i32
    %8 = arith.muli %7, %c128_i32 : i32
    %9 = tpu.iota {dimensions = array<i32: 1>} : vector<1x128xi32>
    %10 = vector.broadcast %8 : i32 to vector<1x128xi32>
    %11 = arith.addi %10, %9 : vector<1x128xi32>
    %c32_i32 = arith.constant 32 : i32
    %12 = vector.broadcast %c32_i32 : i32 to vector<1x128xi32>
    %13 = arith.cmpi slt, %11, %12 : vector<1x128xi32>
    %c999_i32 = arith.constant 999 : i32
    %14 = vector.broadcast %c999_i32 : i32 to vector<1x128xi32>
    %15 = arith.cmpi ne, %4, %14 : vector<1x128xi32>
    %16 = arith.andi %13, %15 : vector<1x128xi1>
    %cst = arith.constant dense<0xFF800000> : vector<128xf32>
    %17 = vector.multi_reduction <maximumf>, %3, %cst [0] : vector<8x128xf32> to vector<128xf32>
    %18 = vector.shape_cast %17 : vector<128xf32> to vector<1x128xf32>
    %19 = vector.broadcast %18 : vector<1x128xf32> to vector<8x128xf32>
    %20 = arith.subf %3, %19 : vector<8x128xf32>
    %21 = math.exp %20 : vector<8x128xf32>
    %cst_6 = arith.constant dense<0.000000e+00> : vector<128xf32>
    %22 = vector.multi_reduction <add>, %21, %cst_6 [0] : vector<8x128xf32> to vector<128xf32>
    %23 = vector.shape_cast %22 : vector<128xf32> to vector<1x128xf32>
    %24 = math.log %23 : vector<1x128xf32>
    %25 = tpu.iota {dimensions = array<i32: 0>} : vector<8x128xi32>
    %26 = vector.broadcast %4 : vector<1x128xi32> to vector<8x128xi32>
    %27 = arith.cmpi eq, %25, %26 : vector<8x128xi32>
    %cst_7 = arith.constant 0.000000e+00 : f32
    %28 = vector.broadcast %cst_7 : f32 to vector<8x128xf32>
    %29 = arith.select %27, %20, %28 : vector<8x128xi1>, vector<8x128xf32>
    %cst_8 = arith.constant dense<0.000000e+00> : vector<128xf32>
    %30 = vector.multi_reduction <add>, %29, %cst_8 [0] : vector<8x128xf32> to vector<128xf32>
    %31 = vector.shape_cast %30 : vector<128xf32> to vector<1x128xf32>
    %cst_9 = arith.constant 0.000000e+00 : f32
    %32 = vector.shape_cast %5 : vector<8x1xf32> to vector<8x1xf32>
    %33 = vector.broadcast %32 : vector<8x1xf32> to vector<8x128xf32>
    %34 = vector.broadcast %cst_9 : f32 to vector<8x128xf32>
    %35 = arith.select %27, %33, %34 : vector<8x128xi1>, vector<8x128xf32>
    %cst_10 = arith.constant dense<0.000000e+00> : vector<128xf32>
    %36 = vector.multi_reduction <add>, %35, %cst_10 [0] : vector<8x128xf32> to vector<128xf32>
    %37 = vector.shape_cast %36 : vector<128xf32> to vector<1x128xf32>
    %38 = arith.subf %24, %31 : vector<1x128xf32>
    %39 = arith.mulf %37, %38 : vector<1x128xf32>
    %c0_11 = arith.constant 0 : index
    %c0_12 = arith.constant 0 : index
    %40 = vector.load %arg5[%c0_11, %c0_12] : memref<1x128xf32, #tpu.memory_space<vmem>>, vector<1x128xf32>
    %41 = arith.mulf %39, %40 : vector<1x128xf32>
    %cst_13 = arith.constant 0.000000e+00 : f32
    %42 = vector.broadcast %cst_13 : f32 to vector<1x128xf32>
    %43 = arith.select %16, %41, %42 : vector<1x128xi1>, vector<1x128xf32>
    %c0_14 = arith.constant 0 : index
    %c0_15 = arith.constant 0 : index
    %44 = vector.load %arg7[%c0_14, %c0_15] : memref<1x128xf32, #tpu.memory_space<vmem>>, vector<1x128xf32>
    %45 = arith.addf %44, %43 : vector<1x128xf32>
    %c0_16 = arith.constant 0 : index
    %c0_17 = arith.constant 0 : index
    %46 = vector.load %arg7[%c0_16, %c0_17] : memref<1x128xf32, #tpu.memory_space<vmem>>, vector<1x128xf32>
    tpu.vector_store %arg7[%c0_16, %c0_17], %45 {strides = array<i32>} : memref<1x128xf32, #tpu.memory_space<vmem>>, vector<1x128xf32>,
    %c0_i32_18 = arith.constant 0 : i32
    %47 = arith.cmpi eq, %arg1, %c0_i32_18 : i32
    %48 = arith.extui %47 : i1 to i32
    %c0_i32_19 = arith.constant 0 : i32
    %49 = arith.cmpi ne, %48, %c0_i32_19 : i32
    scf.if %49 {
      %c0_20 = arith.constant 0 : index
      %c0_21 = arith.constant 0 : index
      %50 = vector.load %arg7[%c0_20, %c0_21] : memref<1x128xf32, #tpu.memory_space<vmem>>, vector<1x128xf32>
      %cst_22 = arith.constant dense<0.000000e+00> : vector<1xf32>
      %51 = vector.multi_reduction <add>, %50, %cst_22 [1] : vector<1x128xf32> to vector<1xf32>
      %52 = vector.shape_cast %51 : vector<1xf32> to vector<1x1xf32>
      %53 = vector.shape_cast %52 : vector<1x1xf32> to vector<1x1x1xf32>
      %c0_23 = arith.constant 0 : index
      %c0_24 = arith.constant 0 : index
      %c0_25 = arith.constant 0 : index
      %54 = vector.load %arg6[%c0_23, %c0_24, %c0_25] : memref<1x1x1xf32, #tpu.memory_space<vmem>>, vector<1x1x1xf32>
      tpu.vector_store %arg6[%c0_23, %c0_24, %c0_25], %53 {strides = array<i32>} : memref<1x1x1xf32, #tpu.memory_space<vmem>>, vector<1x1x1xf32>,
    } else {
    }
    return
  }
  func.func @transform_0(%arg0: i32, %arg1: i32) -> (i32, i32) {
    %c1_i32 = arith.constant 1 : i32
    %0 = arith.muli %arg0, %c1_i32 : i32
    %1 = arith.addi %0, %arg1 : i32
    %c0_i32 = arith.constant 0 : i32
    %2 = arith.minsi %1, %c0_i32 : i32
    %c0_i32_0 = arith.constant 0 : i32
    %c0_i32_1 = arith.constant 0 : i32
    return %c0_i32_0, %2 : i32, i32
  }
  func.func @transform_1(%arg0: i32, %arg1: i32) -> (i32, i32) {
    %c1_i32 = arith.constant 1 : i32
    %0 = arith.muli %arg0, %c1_i32 : i32
    %1 = arith.addi %0, %arg1 : i32
    %c0_i32 = arith.constant 0 : i32
    %2 = arith.minsi %1, %c0_i32 : i32
    %c0_i32_0 = arith.constant 0 : i32
    %c0_i32_1 = arith.constant 0 : i32
    return %c0_i32_0, %2 : i32, i32
  }
  func.func @transform_2(%arg0: i32, %arg1: i32) -> (i32, i32) {
    %c0_i32 = arith.constant 0 : i32
    %c0_i32_0 = arith.constant 0 : i32
    %c0_i32_1 = arith.constant 0 : i32
    return %c0_i32, %c0_i32_0 : i32, i32
  }
  func.func @transform_3(%arg0: i32, %arg1: i32) -> (i32, i32) {
    %c1_i32 = arith.constant 1 : i32
    %0 = arith.muli %arg0, %c1_i32 : i32
    %1 = arith.addi %0, %arg1 : i32
    %c0_i32 = arith.constant 0 : i32
    %2 = arith.minsi %1, %c0_i32 : i32
    %c0_i32_0 = arith.constant 0 : i32
    %c0_i32_1 = arith.constant 0 : i32
    return %c0_i32_0, %2 : i32, i32
  }
  func.func @transform_4(%arg0: i32, %arg1: i32) -> (i32, i32, i32) {
    %c0_i32 = arith.constant 0 : i32
    %c0_i32_0 = arith.constant 0 : i32
    %c0_i32_1 = arith.constant 0 : i32
    return %arg0, %c0_i32, %c0_i32_0 : i32, i32, i32
  }
}

</mosaic_0001>

<llo_original>
// kernel: tpu_custom_call.1
$region0: #{tpu_custom_call.1}
  #allocation0 [shape = 'u32[]', space=smem, size = 0x4, offset = 0x4, fixed_abs, tag = 'smem constant byte address 0x4 - core index']
  #allocation1 [shape = 'u32[144,128]{1,0:T(1,128)}', space=vmem, size = 0x12000, scoped, tag = 'internal scratch']
  #allocation2 [shape = 'f32[1,128]{1,0:T(1,128)}', space=vmem, size = 0x200, scoped, tag = 'scratch operand']
  %s0 = inlined_call_operand.vmem [shape: f32[8,32], index: 0, kind: input, shape index: {}]
  %s1 = inlined_call_operand.vmem [shape: s32[1,32], index: 1, kind: input, shape index: {}]
  %s2 = inlined_call_operand.vmem [shape: f32[8,1], index: 2, kind: input, shape index: {}]
  %s3 = inlined_call_operand.vmem [shape: f32[1,32], index: 3, kind: input, shape index: {}]
  %s4 = inlined_call_operand.vmem [shape: f32[2,1,1], index: 4, kind: output, shape index: {}]
  %s5 = sld [smem:[#allocation0]]
  $region57: #{tpu_custom_call.1} parent=0
    _
  %s7 = ssub.s32 1, %s5
  %s8 = scalar_select 0, %s7, %s5
  loop: start=0, step=1, limit=4
  $region2: #{tpu_custom_call.1} parent=0 // loop_pre_header
    _
  $region3: #{tpu_custom_call.1} parent=0 // loop_header
    %s10 = sphi 0, %s14
    %p11 = scmp.ge.s32.totalorder %s10, 4
    %s17 = sphi 0, %s29
    %s18 = sphi 0, %s25
    %s19 = sphi 0, %s17
    %s20 = sphi 0, %s18
    %s21 = sphi 0, %s19
    %s22 = sphi 0, %s20
    %s38 = sphi 0, %s40
    %s41 = sphi 0, %s38
    %s42 = sphi 0, %s41
    %s58 = sphi 0, %s42
    %s70 = sphi 0, %s72
    %s73 = sphi 0, %s70
    %s74 = sphi 0, %s73
    %s90 = sphi 0, %s74
    %s94 = sphi 0, %s94
    %s96 = sphi 0, %s94
    %s97 = sphi 0, %s96
    %s111 = sphi 0, %s97
    %s123 = sphi 0, %s125
    %s126 = sphi 0, %s123
    %s127 = sphi 0, %s126
    %s143 = sphi 0, %s127
    %s149 = sphi 0, %s151
    %s152 = sphi 0, %s149
    %s153 = sphi 0, %s152
    %s169 = sphi 0, %s153
  $region4: #{tpu_custom_call.1} parent=0 // loop_header_branch
    %13 = sbr.rel (%p11) target = $region8
  $region5: #{tpu_custom_call.1} parent=0 // loop_body
    %s15 = ssub.s32 %s10, 1
    %s16 = ssub.s32 %s10, 2
    %s23 = sadd.s32 1, %s18
    %p24 = scmp.ge.s32.totalorder %s23, 1
    %s25 = scalar_select %p24, 0, %s23
    %s26 = sadd.s32 1, %s17
    %s27 = scalar_select %p24, %s26, %s17
    %p28 = scmp.ge.s32.totalorder %s27, 2
    %s29 = scalar_select %p28, 0, %s27
    %s30 = sadd.s32 %s17, %s18
    %p31 = scmp.lt.s32.totalorder %s30, 0
    %s32 = scalar_select %p31, %s30, 0
    %s33 = sadd.s32 %s29, %s25
    %p34 = scmp.lt.s32.totalorder %s33, 0
    %s35 = scalar_select %p34, %s33, 0
    %s36 = ssub.s32 %s32, %s35
    %p37 = scmp.eq.s32.totalorder %s36, 0
    %s39 = sadd.s32 %s38, 1
    %s40 = scalar_select %p37, %s38, %s39
    %p43 = pneg %p37
    %p44 = scmp.eq.s32.totalorder %s10, 1
    %p45 = por %p43, %p44
    %p46 = scmp.ne.s32.totalorder %s38, %s41
    %p47 = scmp.eq.s32.totalorder %s10, 0
    %p48 = por %p46, %p47
    %p49 = scmp.ne.s32.totalorder %s38, %s41
    %p50 = scmp.eq.s32.totalorder %s15, 1
    %p51 = por %p49, %p50
    %p52 = scmp.ne.s32.totalorder %s41, %s42
    %p53 = scmp.eq.s32.totalorder %s15, 0
    %p54 = por %p52, %p53
    %p55 = scmp.ne.s32.totalorder %s41, %s42
    %p56 = scmp.eq.s32.totalorder %s16, 1
    %p57 = por %p55, %p56
    %p59 = scmp.ne.s32.totalorder %s42, %s58
    %p60 = scmp.eq.s32.totalorder %s16, 0
    %p61 = por %p59, %p60
    %s62 = sadd.s32 %s17, %s18
    %p63 = scmp.lt.s32.totalorder %s62, 0
    %s64 = scalar_select %p63, %s62, 0
    %s65 = sadd.s32 %s29, %s25
    %p66 = scmp.lt.s32.totalorder %s65, 0
    %s67 = scalar_select %p66, %s65, 0
    %s68 = ssub.s32 %s64, %s67
    %p69 = scmp.eq.s32.totalorder %s68, 0
    %s71 = sadd.s32 %s70, 1
    %s72 = scalar_select %p69, %s70, %s71
    %p75 = pneg %p69
    %p76 = scmp.eq.s32.totalorder %s10, 1
    %p77 = por %p75, %p76
    %p78 = scmp.ne.s32.totalorder %s70, %s73
    %p79 = scmp.eq.s32.totalorder %s10, 0
    %p80 = por %p78, %p79
    %p81 = scmp.ne.s32.totalorder %s70, %s73
    %p82 = scmp.eq.s32.totalorder %s15, 1
    %p83 = por %p81, %p82
    %p84 = scmp.ne.s32.totalorder %s73, %s74
    %p85 = scmp.eq.s32.totalorder %s15, 0
    %p86 = por %p84, %p85
    %p87 = scmp.ne.s32.totalorder %s73, %s74
    %p88 = scmp.eq.s32.totalorder %s16, 1
    %p89 = por %p87, %p88
    %p91 = scmp.ne.s32.totalorder %s74, %s90
    %p92 = scmp.eq.s32.totalorder %s16, 0
    %p93 = por %p91, %p92
    %s95 = sadd.s32 %s94, 1
    %p98 = scmp.eq.s32.totalorder %s10, 1
    %p99 = scmp.ne.s32.totalorder %s94, %s96
    %p100 = scmp.eq.s32.totalorder %s10, 0
    %p101 = por %p99, %p100
    %p102 = scmp.ne.s32.totalorder %s94, %s96
    %p103 = scmp.eq.s32.totalorder %s15, 1
    %p104 = por %p102, %p103
    %p105 = scmp.ne.s32.totalorder %s96, %s97
    %p106 = scmp.eq.s32.totalorder %s15, 0
    %p107 = por %p105, %p106
    %p108 = scmp.ne.s32.totalorder %s96, %s97
    %p109 = scmp.eq.s32.totalorder %s16, 1
    %p110 = por %p108, %p109
    %p112 = scmp.ne.s32.totalorder %s97, %s111
    %p113 = scmp.eq.s32.totalorder %s16, 0
    %p114 = por %p112, %p113
    %s115 = sadd.s32 %s17, %s18
    %p116 = scmp.lt.s32.totalorder %s115, 0
    %s117 = scalar_select %p116, %s115, 0
    %s118 = sadd.s32 %s29, %s25
    %p119 = scmp.lt.s32.totalorder %s118, 0
    %s120 = scalar_select %p119, %s118, 0
    %s121 = ssub.s32 %s117, %s120
    %p122 = scmp.eq.s32.totalorder %s121, 0
    %s124 = sadd.s32 %s123, 1
    %s125 = scalar_select %p122, %s123, %s124
    %p128 = pneg %p122
    %p129 = scmp.eq.s32.totalorder %s10, 1
    %p130 = por %p128, %p129
    %p131 = scmp.ne.s32.totalorder %s123, %s126
    %p132 = scmp.eq.s32.totalorder %s10, 0
    %p133 = por %p131, %p132
    %p134 = scmp.ne.s32.totalorder %s123, %s126
    %p135 = scmp.eq.s32.totalorder %s15, 1
    %p136 = por %p134, %p135
    %p137 = scmp.ne.s32.totalorder %s126, %s127
    %p138 = scmp.eq.s32.totalorder %s15, 0
    %p139 = por %p137, %p138
    %p140 = scmp.ne.s32.totalorder %s126, %s127
    %p141 = scmp.eq.s32.totalorder %s16, 1
    %p142 = por %p140, %p141
    %p144 = scmp.ne.s32.totalorder %s127, %s143
    %p145 = scmp.eq.s32.totalorder %s16, 0
    %p146 = por %p144, %p145
    %s147 = ssub.s32 %s17, %s29
    %p148 = scmp.eq.s32.totalorder %s147, 0
    %s150 = sadd.s32 %s149, 1
    %s151 = scalar_select %p148, %s149, %s150
    %p154 = pneg %p148
    %p155 = scmp.eq.s32.totalorder %s10, 1
    %p156 = por %p154, %p155
    %p157 = scmp.ne.s32.totalorder %s149, %s152
    %p158 = scmp.eq.s32.totalorder %s10, 0
    %p159 = por %p157, %p158
    %p160 = scmp.ne.s32.totalorder %s149, %s152
    %p161 = scmp.eq.s32.totalorder %s15, 1
    %p162 = por %p160, %p161
    %p163 = scmp.ne.s32.totalorder %s152, %s153
    %p164 = scmp.eq.s32.totalorder %s15, 0
    %p165 = por %p163, %p164
    %p166 = scmp.ne.s32.totalorder %s152, %s153
    %p167 = scmp.eq.s32.totalorder %s16, 1
    %p168 = por %p166, %p167
    %p170 = scmp.ne.s32.totalorder %s153, %s169
    %p171 = scmp.eq.s32.totalorder %s16, 0
    %p172 = por %p170, %p171
    %p173 = scmp.le.s32.totalorder 1, %s10
    %p174 = scmp.lt.s32.totalorder %s10, 3
    %p175 = pnand %p173, %p174
    %p176 = pneg %p175
    // Predicated region
    $region9: #{tpu_custom_call.1} parent=5 // pred_check
      _
    $region10: #{tpu_custom_call.1} parent=5 // pred_check_branch
      %178 = sbr.rel (%p175) target = $region12
    $region11: #{tpu_custom_call.1} parent=5 // pred_region
      %s179 = ssub.s32 %s10, 1
      // Predicated region
      $region13: #{tpu_custom_call.1} parent=11 // pred_check
        %p180 = pneg %p107
      $region14: #{tpu_custom_call.1} parent=11 // pred_check_branch
        %182 = sbr.rel (%p180) target = $region16
      $region15: #{tpu_custom_call.1} parent=11 // pred_region
        _
      $region16: #{tpu_custom_call.1} parent=11 // pred_fallthru
        _
    $region12: #{tpu_custom_call.1} parent=5 // pred_fallthru
      _
    %p183 = scmp.lt.s32.totalorder %s10, 2
    // Predicated region
    $region17: #{tpu_custom_call.1} parent=5 // pred_check
      %p184 = pneg %p183
    $region18: #{tpu_custom_call.1} parent=5 // pred_check_branch
      %186 = sbr.rel (%p184) target = $region20
    $region19: #{tpu_custom_call.1} parent=5 // pred_region
      // Predicated region
      $region21: #{tpu_custom_call.1} parent=19 // pred_check
        %p187 = pneg %p48
      $region22: #{tpu_custom_call.1} parent=19 // pred_check_branch
        %189 = sbr.rel (%p187) target = $region24
      $region23: #{tpu_custom_call.1} parent=19 // pred_region
        %s190 = sadd.s32 %s17, %s18
        %p191 = scmp.lt.s32.totalorder %s190, 0
        %s192 = scalar_select %p191, %s190, 0
        %p193 = scmp.lt.s32.totalorder %s192, 0
        %s194 = scalar_select %p193, %s192, 0
        %s195 = smul.addr %s194, 8
        %s196 = scalar_lea.vmem %s0, %s195
        %s197 = sadd.s32 %s17, %s18
        %p198 = scmp.lt.s32.totalorder %s197, 0
        %s199 = scalar_select %p198, %s197, 0
      $region24: #{tpu_custom_call.1} parent=19 // pred_fallthru
        _
      // Predicated region
      $region25: #{tpu_custom_call.1} parent=19 // pred_check
        %p200 = pneg %p80
      $region26: #{tpu_custom_call.1} parent=19 // pred_check_branch
        %202 = sbr.rel (%p200) target = $region28
      $region27: #{tpu_custom_call.1} parent=19 // pred_region
        %s203 = sadd.s32 %s17, %s18
        %p204 = scmp.lt.s32.totalorder %s203, 0
        %s205 = scalar_select %p204, %s203, 0
        %p206 = scmp.lt.s32.totalorder %s205, 0
        %s207 = scalar_select %p206, %s205, 0
        %s208 = scalar_lea.vmem %s1, %s207
        %s209 = sadd.s32 %s17, %s18
        %p210 = scmp.lt.s32.totalorder %s209, 0
        %s211 = scalar_select %p210, %s209, 0
      $region28: #{tpu_custom_call.1} parent=19 // pred_fallthru
        _
      // Predicated region
      $region29: #{tpu_custom_call.1} parent=19 // pred_check
        %p212 = pneg %p133
      $region30: #{tpu_custom_call.1} parent=19 // pred_check_branch
        %214 = sbr.rel (%p212) target = $region32
      $region31: #{tpu_custom_call.1} parent=19 // pred_region
        %s215 = sadd.s32 %s17, %s18
        %p216 = scmp.lt.s32.totalorder %s215, 0
        %s217 = scalar_select %p216, %s215, 0
        %p218 = scmp.lt.s32.totalorder %s217, 0
        %s219 = scalar_select %p218, %s217, 0
        %s220 = scalar_lea.vmem %s3, %s219
        %s221 = sadd.s32 %s17, %s18
        %p222 = scmp.lt.s32.totalorder %s221, 0
        %s223 = scalar_select %p222, %s221, 0
      $region32: #{tpu_custom_call.1} parent=19 // pred_fallthru
        _
    $region20: #{tpu_custom_call.1} parent=5 // pred_fallthru
      _
    %p224 = scmp.le.s32.totalorder 1, %s10
    %p225 = scmp.lt.s32.totalorder %s10, 3
    %p226 = pnand %p224, %p225
    %p227 = pneg %p226
    // Predicated region
    $region33: #{tpu_custom_call.1} parent=5 // pred_check
      _
    $region34: #{tpu_custom_call.1} parent=5 // pred_check_branch
      %229 = sbr.rel (%p226) target = $region36
    $region35: #{tpu_custom_call.1} parent=5 // pred_region
      %s230 = ssub.s32 %s10, 1
      %s231 = sadd.s32 %s19, %s20
      %p232 = scmp.lt.s32.totalorder %s231, 0
      %s233 = scalar_select %p232, %s231, 0
      %p234 = scmp.lt.s32.totalorder %s233, 0
      %s235 = scalar_select %p234, %s233, 0
      %s236 = smul.addr %s235, 8
      %s237 = scalar_lea.vmem %s0, %s236
      %p238 = pneg %p54
      %p239 = pneg %p51
      %s240 = sadd.s32 %s19, %s20
      %p241 = scmp.lt.s32.totalorder %s240, 0
      %s242 = scalar_select %p241, %s240, 0
      %p243 = scmp.lt.s32.totalorder %s242, 0
      %s244 = scalar_select %p243, %s242, 0
      %s245 = scalar_lea.vmem %s1, %s244
      %p246 = pneg %p86
      %p247 = pneg %p83
      %p248 = pneg %p107
      %p249 = pneg %p104
      %s250 = sadd.s32 %s19, %s20
      %p251 = scmp.lt.s32.totalorder %s250, 0
      %s252 = scalar_select %p251, %s250, 0
      %p253 = scmp.lt.s32.totalorder %s252, 0
      %s254 = scalar_select %p253, %s252, 0
      %s255 = scalar_lea.vmem %s3, %s254
      %p256 = pneg %p139
      %p257 = pneg %p136
      %p258 = pneg %p165
      %p259 = pneg %p162
      %p260 = scmp.lt.s32.totalorder %s19, 1
      %s261 = scalar_select %p260, %s19, 1
      %s262 = scalar_lea.vmem %s4, %s261
      %s263 = sadd.s32 %s19, %s20
      %p264 = scmp.lt.s32.totalorder %s263, 0
      %s265 = scalar_select %p264, %s263, 0
      %p266 = scmp.lt.s32.totalorder %s265, 0
      %s267 = scalar_select %p266, %s265, 0
      %s268 = smul.addr %s267, 8
      %s269 = scalar_lea.vmem %s0, %s268
      %s270 = sadd.s32 %s19, %s20
      %p271 = scmp.lt.s32.totalorder %s270, 0
      %s272 = scalar_select %p271, %s270, 0
      %s273 = sadd.s32 %s19, %s20
      %p274 = scmp.lt.s32.totalorder %s273, 0
      %s275 = scalar_select %p274, %s273, 0
      %p276 = scmp.lt.s32.totalorder %s275, 0
      %s277 = scalar_select %p276, %s275, 0
      %s278 = scalar_lea.vmem %s1, %s277
      %s279 = sadd.s32 %s19, %s20
      %p280 = scmp.lt.s32.totalorder %s279, 0
      %s281 = scalar_select %p280, %s279, 0
      %s282 = sadd.s32 %s19, %s20
      %p283 = scmp.lt.s32.totalorder %s282, 0
      %s284 = scalar_select %p283, %s282, 0
      %p285 = scmp.lt.s32.totalorder %s284, 0
      %s286 = scalar_select %p285, %s284, 0
      %s287 = scalar_lea.vmem %s3, %s286
      %s288 = sadd.s32 %s19, %s20
      %p289 = scmp.lt.s32.totalorder %s288, 0
      %s290 = scalar_select %p289, %s288, 0
      %p291 = scmp.lt.s32.totalorder %s19, 1
      %s292 = scalar_select %p291, %s19, 1
      %s293 = scalar_lea.vmem %s4, %s292
      %p294 = scmp.eq.s32.totalorder %s20, 0
      // Predicated region
      $region37: #{tpu_custom_call.1} parent=35 // pred_check
        %p295 = pneg %p294
      $region38: #{tpu_custom_call.1} parent=35 // pred_check_branch
        %297 = sbr.rel (%p295) target = $region40
      $region39: #{tpu_custom_call.1} parent=35 // pred_region
        %298 = vst [vmem:[#allocation2] sm:$0x1] 0.0
      $region40: #{tpu_custom_call.1} parent=35 // pred_fallthru
        _
      %v299 = vld [vmem:[%s269] sm:$0xff]
      %v300 = vld [vmem:[%s278] sm:$0x1]
      %v301 = vld [vmem:[%s2] sm:$0xff]
      %s302 = sadd.s32 %s19, %s20
      %s303 = smul.u32 %s302, 128
      %v304 = vlaneseq
      %v305 = vand.u32 %v304, 127
      %v306 = vstv %s303
      %v307 = vadd.s32 %v306, %v305
      %vm308 = vcmp.lt.s32.totalorder %v307, 32
      %vm309 = vcmp.ne.s32.totalorder %v300, 999
      %vm310 = vmand %vm308, %vm309
      %v311 = vrot.slane %v299, 4
      %v312 = vmax.f32 %v299, %v311
      %v313 = vrot.slane %v312, 2
      %v314 = vmax.f32 %v312, %v313
      %v315 = vrot.slane %v314, 1
      %v316 = vmax.f32 %v314, %v315
      %v317 = vsub.f32 %v299, %v316
      %v318 = vmul.f32 %v317, 1.442695
      %v319 = vpow.pop %v318
      %v320 = vrot.slane %v319, 4
      %v321 = vadd.f32 %v319, %v320
      %v322 = vrot.slane %v321, 2
      %v323 = vadd.f32 %v321, %v322
      %v324 = vrot.slane %v323, 1
      %v325 = vadd.f32 %v323, %v324
      %v326 = vlog2.pop %v325
      %v327 = vmul.f32 %v326, 0.6931472
      %v328 = vlaneseq
      %v329 = vshrl.u32 %v328, 7
      %v330 = vlaneseq
      %v331 = vshrl.u32 %v330, 7
      %v332 = vsub.s32 0, %v331
      %v333 = vrot.slane %v300, %v332
      %vm334 = vcmp.eq.s32.totalorder %v329, %v333
      %v335 = vsel %vm334, %v317, 0.0
      %v336 = vrot.slane %v335, 4
      %v337 = vadd.f32 %v335, %v336
      %v338 = vrot.slane %v337, 2
      %v339 = vadd.f32 %v337, %v338
      %v340 = vrot.slane %v339, 1
      %v341 = vadd.f32 %v339, %v340
      %343 = vset.pattern.permute.xlu0 0
      %344 = vperm.xlu0 %343, %v301
      %v345 = vpop.permute.xlu0 %344
      %v347 = vsel %vm334, %v345, 0.0
      %v348 = vrot.slane %v347, 4
      %v349 = vadd.f32 %v347, %v348
      %v350 = vrot.slane %v349, 2
      %v351 = vadd.f32 %v349, %v350
      %v352 = vrot.slane %v351, 1
      %v353 = vadd.f32 %v351, %v352
      %v354 = vsub.f32 %v327, %v341
      %v355 = vmul.f32 %v353, %v354
      %v356 = vld [vmem:[%s287] sm:$0x1]
      %v357 = vmul.f32 %v355, %v356
      %v358 = vsel %vm310, %v357, 0.0
      %v359 = vld [vmem:[#allocation2] sm:$0x1]
      %v360 = vadd.f32 %v359, %v358
      %361 = vst [vmem:[#allocation2] sm:$0x1] %v360
      // Predicated region
      $region41: #{tpu_custom_call.1} parent=35 // pred_check
        %p362 = pneg %p294
      $region42: #{tpu_custom_call.1} parent=35 // pred_check_branch
        %364 = sbr.rel (%p362) target = $region44
      $region43: #{tpu_custom_call.1} parent=35 // pred_region
        %v365 = vld [vmem:[#allocation2] sm:$0x1]
        %vm366 = vcmask 1040384
        %v367 = vsel %vm366, %v365, 0.0
        %368 = vadd.xlane.f32.xlu0 %v367
        %v369 = vpop.xlane.xlu0 %368
        %vm370 = vcmask 0
        %371 = vst.msk [vmem:[%s293] sm:$0x1] %vm370, %v369
      $region44: #{tpu_custom_call.1} parent=35 // pred_fallthru
        _
      %p372 = scmp.lt.s32.totalorder %s19, 1
      %s373 = scalar_select %p372, %s19, 1
      %s374 = scalar_lea.vmem %s4, %s373
      // Predicated region
      $region45: #{tpu_custom_call.1} parent=35 // pred_check
        %p375 = pneg %p162
      $region46: #{tpu_custom_call.1} parent=35 // pred_check_branch
        %377 = sbr.rel (%p375) target = $region48
      $region47: #{tpu_custom_call.1} parent=35 // pred_region
        _
      $region48: #{tpu_custom_call.1} parent=35 // pred_fallthru
        _
    $region36: #{tpu_custom_call.1} parent=5 // pred_fallthru
      _
    %p378 = scmp.le.s32.totalorder 2, %s10
    // Predicated region
    $region49: #{tpu_custom_call.1} parent=5 // pred_check
      %p379 = pneg %p378
    $region50: #{tpu_custom_call.1} parent=5 // pred_check_branch
      %381 = sbr.rel (%p379) target = $region52
    $region51: #{tpu_custom_call.1} parent=5 // pred_region
      %s382 = ssub.s32 %s10, 2
      // Predicated region
      $region53: #{tpu_custom_call.1} parent=51 // pred_check
        %p383 = pneg %p168
      $region54: #{tpu_custom_call.1} parent=51 // pred_check_branch
        %385 = sbr.rel (%p383) target = $region56
      $region55: #{tpu_custom_call.1} parent=51 // pred_region
        %p386 = scmp.lt.s32.totalorder %s21, 1
        %s387 = scalar_select %p386, %s21, 1
        %s388 = scalar_lea.vmem %s4, %s387
      $region56: #{tpu_custom_call.1} parent=51 // pred_fallthru
        _
    $region52: #{tpu_custom_call.1} parent=5 // pred_fallthru
      _
  $region6: #{tpu_custom_call.1} parent=0 // loop_footer
    %s14 = sadd.s32 1, %s10
  $region7: #{tpu_custom_call.1} parent=0 // loop_footer_branch
    %9 = sbr.rel target = $region3
  $region8: #{tpu_custom_call.1} parent=0 // loop_exit
    _

</llo_original>
